<compile_context>
chip_gen: v5e
topology: v5e:2x2
jax: 0.10.0
libtpu: 0.0.40
codegen_flags: <defaults>
</compile_context>

<pallas_src>
import jax
import jax.numpy as jnp
from jax import lax
from jax.experimental import pallas as pl
from jax.experimental.pallas import tpu as pltpu


def _round_up(x, m):
    return (x + m - 1) // m * m


# ---------------------------- kernels ---------------------------------------

def _conv_stats_kernel(p_ref, w_ref, st_ref):
    # Recompute path, pass A: conv matmul, emit only BN stat partials.
    # p_ref : (1, TM, Kc_pad)     bf16 im2col patches for one (batch, row-tile)
    # w_ref : (Kc_pad, Cout_pad)  bf16 fused-tap weight matrix
    # st_ref: (1, 1, 8, Cout_pad) f32 partials (row 0 = sum, row 1 = sum-sq)
    acc = jnp.dot(p_ref[0], w_ref[...], preferred_element_type=jnp.float32)
    s = jnp.sum(acc, axis=0, keepdims=True)
    q = jnp.sum(acc * acc, axis=0, keepdims=True)
    pad = jnp.zeros((6, acc.shape[1]), jnp.float32)
    st_ref[0, 0] = jnp.concatenate([s, q, pad], axis=0)   # one full-vreg store


def _conv_bn_relu_kernel(p_ref, w_ref, scale_ref, shift_ref, o_ref):
    # Recompute path, pass B: conv matmul fused with BN apply + ReLU.
    acc = jnp.dot(p_ref[0], w_ref[...], preferred_element_type=jnp.float32)
    o_ref[0] = jnp.maximum(acc * scale_ref[...] + shift_ref[...],
                           jnp.float32(0.0))


def _conv_y_stats_kernel(p_ref, w_ref, y_ref, st_ref):
    # Store path, pass A: conv matmul, keep f32 y, emit BN stat partials.
    acc = jnp.dot(p_ref[0], w_ref[...], preferred_element_type=jnp.float32)
    y_ref[0] = acc
    s = jnp.sum(acc, axis=0, keepdims=True)
    q = jnp.sum(acc * acc, axis=0, keepdims=True)
    pad = jnp.zeros((6, acc.shape[1]), jnp.float32)
    st_ref[0, 0] = jnp.concatenate([s, q, pad], axis=0)


def _bn_relu_kernel(y_ref, scale_ref, shift_ref, o_ref):
    # Store path, pass B: BN apply + ReLU on the stored f32 conv output.
    o_ref[0] = jnp.maximum(y_ref[0] * scale_ref[...] + shift_ref[...],
                           jnp.float32(0.0))


# ---------------------------- wrapper ----------------------------------------

def conv_bn_act(x_nchw, w_oihw, gamma, beta, *, stride=1, padding=1, eps=1e-5):
    N, Cin, H, W = x_nchw.shape
    Cout, Cin_w, KH, KW = w_oihw.shape
    assert Cin == Cin_w
    # TODO(synk): groups / dilation are not exposed by the module and are not
    # implemented here.

    Ho = (H + 2 * padding - KH) // stride + 1
    Wo = (W + 2 * padding - KW) // stride + 1

    # ---- Layout glue (XLA, one-time): NCHW->NHWC, zero pad, im2col, bf16. ---
    x_nhwc = jnp.transpose(x_nchw, (0, 2, 3, 1)).astype(jnp.float32)
    x_pad = jnp.pad(x_nhwc,
                    ((0, 0), (padding, padding), (padding, padding), (0, 0)))
    cols = []
    for kh in range(KH):
        for kw in range(KW):
            cols.append(
                x_pad[:, kh:kh + stride * (Ho - 1) + 1:stride,
                      kw:kw + stride * (Wo - 1) + 1:stride, :])
    patches = jnp.concatenate(cols, axis=-1)           # (N, Ho, Wo, KH*KW*Cin)
    Kc = KH * KW * Cin
    patches = patches.reshape(N, Ho * Wo, Kc)

    # Pad to MXU / lane-friendly sizes (zero padding keeps matmul & stats exact).
    Kc_pad = _round_up(Kc, 128)
    Cout_pad = _round_up(Cout, 128)
    M = Ho * Wo
    # Balanced row tiles: as large as possible (<= 512) with minimal dead rows.
    MB = max(1, -(-M // 512))
    TM = _round_up(-(-M // MB), 8)
    M_pad = TM * MB

    patches = jnp.pad(patches, ((0, 0), (0, M_pad - M), (0, Kc_pad - Kc)))
    patches = patches.astype(jnp.bfloat16)

    # OIHW weight -> fused (KH*KW*Cin, Cout) matrix, padded, bf16.
    w_mat = jnp.transpose(w_oihw, (2, 3, 1, 0)).astype(jnp.float32)
    w_mat = w_mat.reshape(Kc, Cout)
    w_mat = jnp.pad(w_mat, ((0, Kc_pad - Kc), (0, Cout_pad - Cout)))
    w_mat = w_mat.astype(jnp.bfloat16)

    grid = (N, MB)
    par = pltpu.CompilerParams(dimension_semantics=("parallel", "parallel"))
    p_spec = pl.BlockSpec((1, TM, Kc_pad), lambda n, m: (n, m, 0))
    # TODO(synk): the constant weight block is still double-buffered by the
    # default pipeliner; at these sizes (<= ~320 KiB bf16) that is negligible.
    w_spec = pl.BlockSpec((Kc_pad, Cout_pad), lambda n, m: (0, 0))
    v_spec = pl.BlockSpec((1, Cout_pad), lambda n, m: (0, 0))
    y_spec = pl.BlockSpec((1, TM, Cout_pad), lambda n, m: (n, m, 0))
    st_spec = pl.BlockSpec((1, 1, 8, Cout_pad), lambda n, m: (n, m, 0, 0))
    st_shape = jax.ShapeDtypeStruct((N, MB, 8, Cout_pad), jnp.float32)
    y_shape = jax.ShapeDtypeStruct((N, M_pad, Cout_pad), jnp.float32)

    # HBM bytes per output row:  recompute = 4*Kc_pad + 4*Cout_pad
    #                            store     = 2*Kc_pad + 12*Cout_pad
    # (bf16 patches, f32 intermediate / output).  Recompute doubles the MXU
    # flops but both variants sit far below the bf16 roofline crossover.
    recompute = 2 * Kc_pad < 8 * Cout_pad

    # ---- Pass A: conv matmul + per-tile BN stat partials. -------------------
    if recompute:
        stats = pl.pallas_call(
            _conv_stats_kernel,
            out_shape=st_shape,
            grid_spec=pltpu.PrefetchScalarGridSpec(
                num_scalar_prefetch=0, grid=grid,
                in_specs=[p_spec, w_spec], out_specs=st_spec),
            compiler_params=par,
        )(patches, w_mat)
        y_conv = None
    else:
        y_conv, stats = pl.pallas_call(
            _conv_y_stats_kernel,
            out_shape=(y_shape, st_shape),
            grid_spec=pltpu.PrefetchScalarGridSpec(
                num_scalar_prefetch=0, grid=grid,
                in_specs=[p_spec, w_spec], out_specs=[y_spec, st_spec]),
            compiler_params=par,
        )(patches, w_mat)

    # ---- Scalar glue: reduce partials, fold BN into per-channel scale/shift.
    # (Padded rows / channels contribute exact zeros to both sums.)
    ch_sum = jnp.sum(stats[:, :, 0, :], axis=(0, 1))
    ch_ssq = jnp.sum(stats[:, :, 1, :], axis=(0, 1))
    m = N * Ho * Wo
    mean = ch_sum / m
    var = ch_ssq / m - mean * mean          # biased variance (BN training mode)
    invstd = lax.rsqrt(var + eps)
    gamma_p = jnp.pad(gamma.astype(jnp.float32), (0, Cout_pad - Cout))
    beta_p = jnp.pad(beta.astype(jnp.float32), (0, Cout_pad - Cout))
    scale = (gamma_p * invstd).reshape(1, Cout_pad)
    shift = (beta_p - mean * gamma_p * invstd).reshape(1, Cout_pad)

    # ---- Pass B: BN apply + ReLU (lane-dense, fully parallel grid). ---------
    if recompute:
        out_flat = pl.pallas_call(
            _conv_bn_relu_kernel,
            out_shape=y_shape,
            grid_spec=pltpu.PrefetchScalarGridSpec(
                num_scalar_prefetch=0, grid=grid,
                in_specs=[p_spec, w_spec, v_spec, v_spec],
                out_specs=y_spec),
            compiler_params=par,
        )(patches, w_mat, scale, shift)
    else:
        out_flat = pl.pallas_call(
            _bn_relu_kernel,
            out_shape=y_shape,
            grid_spec=pltpu.PrefetchScalarGridSpec(
                num_scalar_prefetch=0, grid=grid,
                in_specs=[y_spec, v_spec, v_spec],
                out_specs=y_spec),
            compiler_params=par,
        )(y_conv, scale, shift)

    out = out_flat[:, :M, :Cout].reshape(N, Ho, Wo, Cout)
    return jnp.transpose(out, (0, 3, 1, 2))            # back to NCHW


if __name__ == "__main__":
    key = jax.random.PRNGKey(0)
    kx, kw = jax.random.split(key)

    N, Cin, H, W = 2, 4, 16, 16
    Cout, K = 8, 3

    x = jax.random.normal(kx, (N, Cin, H, W), dtype=jnp.float32)
    w = 0.1 * jax.random.normal(kw, (Cout, Cin, K, K), dtype=jnp.float32)
    # BatchNorm affine params (PyTorch init is ones/zeros; use deterministic
    # non-trivial values to exercise the broadcast path).
    gamma = 1.0 + 0.1 * jnp.arange(Cout, dtype=jnp.float32)
    beta = 0.01 * jnp.arange(Cout, dtype=jnp.float32)

    out = jax.block_until_ready(conv_bn_act(x, w, gamma, beta))

    # Plain-JAX reference (conv + training-mode BN + ReLU).  Inputs are cast
    # through bf16 to match the kernel's MXU input precision (accumulation
    # stays f32 in both paths).
    xb = x.astype(jnp.bfloat16).astype(jnp.float32)
    wb = w.astype(jnp.bfloat16).astype(jnp.float32)
    x_nhwc = jnp.transpose(xb, (0, 2, 3, 1))
    w_hwio = jnp.transpose(wb, (2, 3, 1, 0))
    y_ref = lax.conv_general_dilated(
        x_nhwc, w_hwio, window_strides=(1, 1), padding=((1, 1), (1, 1)),
        dimension_numbers=("NHWC", "HWIO", "NHWC"),
        precision=lax.Precision.HIGHEST)
    mean = y_ref.mean(axis=(0, 1, 2))
    var = y_ref.var(axis=(0, 1, 2))
    ref = jnp.maximum((y_ref - mean) / jnp.sqrt(var + 1e-5) * gamma + beta, 0.0)
    ref = jnp.transpose(ref, (0, 3, 1, 2))

    assert out.shape == (N, Cout, H, W), out.shape
    max_err = float(jnp.max(jnp.abs(out - ref)))
    assert jnp.allclose(out, ref, atol=2e-3, rtol=2e-3), max_err
    print("KERNEL_OK")
</pallas_src>

<mosaic_0001>
module attributes {stable_mosaic.version = 11 : i64} {
  func.func @_conv_stats_kernel(%arg0: i32, %arg1: i32, %arg2: memref<1x256x128xbf16, #tpu.memory_space<vmem>>, %arg3: memref<128x128xbf16, #tpu.memory_space<vmem>>, %arg4: memref<1x1x8x128xf32, #tpu.memory_space<vmem>>) attributes {dimension_semantics = [#tpu.dimension_semantics<parallel>, #tpu.dimension_semantics<parallel>], iteration_bounds = array<i64: 2, 1>, scalar_prefetch = 0 : i64, scratch_operands = 0 : i64, tpu.core_type = #tpu.core_type<tc>, window_params = [{transform_indices = @transform_0, window_bounds = array<i64: 1, 256, 128>}, {pipeline_mode = #tpu.pipeline_mode<synchronous>, transform_indices = @transform_1, window_bounds = array<i64: 128, 128>}, {transform_indices = @transform_2, window_bounds = array<i64: 1, 1, 8, 128>}]} {
    %c0 = arith.constant 0 : index
    %c0_0 = arith.constant 0 : index
    %c0_1 = arith.constant 0 : index
    %0 = vector.load %arg2[%c0, %c0_0, %c0_1] : memref<1x256x128xbf16, #tpu.memory_space<vmem>>, vector<1x256x128xbf16>
    %1 = vector.shape_cast %0 : vector<1x256x128xbf16> to vector<256x128xbf16>
    %c0_2 = arith.constant 0 : index
    %c0_3 = arith.constant 0 : index
    %2 = vector.load %arg3[%c0_2, %c0_3] : memref<128x128xbf16, #tpu.memory_space<vmem>>, vector<128x128xbf16>
    %cst = arith.constant dense<0.000000e+00> : vector<256x128xf32>
    %3 = tpu.matmul %1, %2, %cst {dimension_numbers = #tpu.dot_dimension_numbers<[1], [0], [0], [1], [0, 0, 1, 1], [], []>} : vector<256x128xbf16>, vector<128x128xbf16>, vector<256x128xf32> -> vector<256x128xf32>
    %cst_4 = arith.constant dense<0.000000e+00> : vector<128xf32>
    %4 = vector.multi_reduction <add>, %3, %cst_4 [0] : vector<256x128xf32> to vector<128xf32>
    %5 = vector.shape_cast %4 : vector<128xf32> to vector<1x128xf32>
    %6 = arith.mulf %3, %3 : vector<256x128xf32>
    %cst_5 = arith.constant dense<0.000000e+00> : vector<128xf32>
    %7 = vector.multi_reduction <add>, %6, %cst_5 [0] : vector<256x128xf32> to vector<128xf32>
    %8 = vector.shape_cast %7 : vector<128xf32> to vector<1x128xf32>
    %cst_6 = arith.constant 0.000000e+00 : f32
    %9 = vector.broadcast %cst_6 : f32 to vector<6x128xf32>
    %10 = tpu.concatenate %5, %8, %9 in 0 : vector<1x128xf32>, vector<1x128xf32>, vector<6x128xf32> -> vector<8x128xf32>
    %c0_7 = arith.constant 0 : index
    %c0_8 = arith.constant 0 : index
    %c0_9 = arith.constant 0 : index
    %c0_10 = arith.constant 0 : index
    %11 = vector.load %arg4[%c0_7, %c0_8, %c0_9, %c0_10] : memref<1x1x8x128xf32, #tpu.memory_space<vmem>>, vector<1x1x8x128xf32>
    %12 = vector.shape_cast %11 : vector<1x1x8x128xf32> to vector<8x128xf32>
    %13 = vector.shape_cast %10 : vector<8x128xf32> to vector<1x1x8x128xf32>
    tpu.vector_store %arg4[%c0_7, %c0_8, %c0_9, %c0_10], %13 {strides = array<i32>} : memref<1x1x8x128xf32, #tpu.memory_space<vmem>>, vector<1x1x8x128xf32>,
    return
  }
  func.func @transform_0(%arg0: i32, %arg1: i32) -> (i32, i32, i32) {
    %c0_i32 = arith.constant 0 : i32
    %c0_i32_0 = arith.constant 0 : i32
    return %arg0, %arg1, %c0_i32 : i32, i32, i32
  }
  func.func @transform_1(%arg0: i32, %arg1: i32) -> (i32, i32) {
    %c0_i32 = arith.constant 0 : i32
    %c0_i32_0 = arith.constant 0 : i32
    %c0_i32_1 = arith.constant 0 : i32
    return %c0_i32, %c0_i32_0 : i32, i32
  }
  func.func @transform_2(%arg0: i32, %arg1: i32) -> (i32, i32, i32, i32) {
    %c0_i32 = arith.constant 0 : i32
    %c0_i32_0 = arith.constant 0 : i32
    %c0_i32_1 = arith.constant 0 : i32
    return %arg0, %arg1, %c0_i32, %c0_i32_0 : i32, i32, i32, i32
  }
}

</mosaic_0001>

<llo_original>
// kernel: tpu_custom_call.1
$region0: #{tpu_custom_call.1}
  #allocation0 [shape = 'u32[]', space=smem, size = 0x4, offset = 0x4, fixed_abs, tag = 'smem constant byte address 0x4 - core index']
  #allocation1 [shape = 'u32[72,128]{1,0:T(1,128)}', space=vmem, size = 0x9000, scoped, tag = 'internal scratch']
  %s0 = inlined_call_operand.hbm [shape: bf16[2,256,128], index: 0, kind: input, shape index: {}]
  %s1 = inlined_call_operand.hbm [shape: bf16[128,128], index: 1, kind: input, shape index: {}]
  %s2 = inlined_call_operand.hbm [shape: f32[2,1,8,128], index: 2, kind: output, shape index: {}]
  %s3 = sld [smem:[#allocation0]]
  $region49: #{tpu_custom_call.1} parent=0
    _
  %s5 = ssub.s32 1, %s3
  %s6 = scalar_select 0, %s5, %s3
  $region1: #{tpu_custom_call.1} parent=0
    #allocation2 [shape = 'u8[131072]{0}', space=vmem, size = 0x20000, scoped, tag = 'input window, operand 0']
    #allocation3 [shape = 's32[2]{0}', space=sflag, size = 0x8, scoped, tag = 'scoped memory for tpu_custom_call.1']
    #allocation4 [shape = 's32[2]{0}', space=sflag, size = 0x8, scoped, tag = 'scoped memory for tpu_custom_call.1']
    #allocation5 [shape = 'u8[32768]{0}', space=vmem, size = 0x8000, scoped, tag = 'input window, operand 1, single buffered']
    #allocation6 [shape = 's32[1]{0}', space=sflag, size = 0x4, scoped, tag = 'scoped memory for tpu_custom_call.1']
    #allocation7 [shape = 'u8[8192]{0}', space=vmem, size = 0x2000, scoped, tag = 'output window, operand 0']
    %7 = vsyncpa [#allocation3], 0
    %s8 = scalar_lea.sflag [#allocation3], 1
    %9 = vsyncpa %s8, 0
    %10 = vsyncpa [#allocation6], 0
    %11 = vsyncpa [#allocation4], 0
    %s12 = scalar_lea.sflag [#allocation4], 1
    %13 = vsyncpa %s12, 0
    loop: start=0, step=1, limit=4
    $region2: #{tpu_custom_call.1} parent=1 // loop_pre_header
      _
    $region3: #{tpu_custom_call.1} parent=1 // loop_header
      %s15 = sphi 0, %s19
      %p16 = scmp.ge.s32.totalorder %s15, 4
      %s22 = sphi 0, %s34
      %s23 = sphi 0, %s30
      %s24 = sphi 0, %s22
      %s25 = sphi 0, %s23
      %s26 = sphi 0, %s24
      %s27 = sphi 0, %s25
      %s39 = sphi 0, %s41
      %s42 = sphi 0, %s39
      %s43 = sphi 0, %s42
      %s59 = sphi 0, %s43
      %s63 = sphi 0, %s63
      %s65 = sphi 0, %s63
      %s66 = sphi 0, %s65
      %s80 = sphi 0, %s66
      %s88 = sphi 0, %s90
      %s91 = sphi 0, %s88
      %s92 = sphi 0, %s91
      %s108 = sphi 0, %s92
    $region4: #{tpu_custom_call.1} parent=1 // loop_header_branch
      %18 = sbr.rel (%p16) target = $region8
    $region5: #{tpu_custom_call.1} parent=1 // loop_body
      %s20 = ssub.s32 %s15, 1
      %s21 = ssub.s32 %s15, 2
      %s28 = sadd.s32 1, %s23
      %p29 = scmp.ge.s32.totalorder %s28, 1
      %s30 = scalar_select %p29, 0, %s28
      %s31 = sadd.s32 1, %s22
      %s32 = scalar_select %p29, %s31, %s22
      %p33 = scmp.ge.s32.totalorder %s32, 2
      %s34 = scalar_select %p33, 0, %s32
      %s35 = ssub.s32 %s22, %s34
      %s36 = ssub.s32 %s23, %s30
      %s37 = sor.u32 %s35, %s36
      %p38 = scmp.eq.s32.totalorder %s37, 0
      %s40 = sadd.s32 %s39, 1
      %s41 = scalar_select %p38, %s39, %s40
      %p44 = pneg %p38
      %p45 = scmp.eq.s32.totalorder %s15, 1
      %p46 = por %p44, %p45
      %p47 = scmp.ne.s32.totalorder %s39, %s42
      %p48 = scmp.eq.s32.totalorder %s15, 0
      %p49 = por %p47, %p48
      %p50 = scmp.ne.s32.totalorder %s39, %s42
      %p51 = scmp.eq.s32.totalorder %s20, 1
      %p52 = por %p50, %p51
      %p53 = scmp.ne.s32.totalorder %s42, %s43
      %p54 = scmp.eq.s32.totalorder %s20, 0
      %p55 = por %p53, %p54
      %p56 = scmp.ne.s32.totalorder %s42, %s43
      %p57 = scmp.eq.s32.totalorder %s21, 1
      %p58 = por %p56, %p57
      %p60 = scmp.ne.s32.totalorder %s43, %s59
      %p61 = scmp.eq.s32.totalorder %s21, 0
      %p62 = por %p60, %p61
      %s64 = sadd.s32 %s63, 1
      %p67 = scmp.eq.s32.totalorder %s15, 1
      %p68 = scmp.ne.s32.totalorder %s63, %s65
      %p69 = scmp.eq.s32.totalorder %s15, 0
      %p70 = por %p68, %p69
      %p71 = scmp.ne.s32.totalorder %s63, %s65
      %p72 = scmp.eq.s32.totalorder %s20, 1
      %p73 = por %p71, %p72
      %p74 = scmp.ne.s32.totalorder %s65, %s66
      %p75 = scmp.eq.s32.totalorder %s20, 0
      %p76 = por %p74, %p75
      %p77 = scmp.ne.s32.totalorder %s65, %s66
      %p78 = scmp.eq.s32.totalorder %s21, 1
      %p79 = por %p77, %p78
      %p81 = scmp.ne.s32.totalorder %s66, %s80
      %p82 = scmp.eq.s32.totalorder %s21, 0
      %p83 = por %p81, %p82
      %s84 = ssub.s32 %s22, %s34
      %s85 = ssub.s32 %s23, %s30
      %s86 = sor.u32 %s84, %s85
      %p87 = scmp.eq.s32.totalorder %s86, 0
      %s89 = sadd.s32 %s88, 1
      %s90 = scalar_select %p87, %s88, %s89
      %p93 = pneg %p87
      %p94 = scmp.eq.s32.totalorder %s15, 1
      %p95 = por %p93, %p94
      %p96 = scmp.ne.s32.totalorder %s88, %s91
      %p97 = scmp.eq.s32.totalorder %s15, 0
      %p98 = por %p96, %p97
      %p99 = scmp.ne.s32.totalorder %s88, %s91
      %p100 = scmp.eq.s32.totalorder %s20, 1
      %p101 = por %p99, %p100
      %p102 = scmp.ne.s32.totalorder %s91, %s92
      %p103 = scmp.eq.s32.totalorder %s20, 0
      %p104 = por %p102, %p103
      %p105 = scmp.ne.s32.totalorder %s91, %s92
      %p106 = scmp.eq.s32.totalorder %s21, 1
      %p107 = por %p105, %p106
      %p109 = scmp.ne.s32.totalorder %s92, %s108
      %p110 = scmp.eq.s32.totalorder %s21, 0
      %p111 = por %p109, %p110
      %p112 = scmp.le.s32.totalorder 1, %s15
      %p113 = scmp.lt.s32.totalorder %s15, 3
      %p114 = pnand %p112, %p113
      %p115 = pneg %p114
      // Predicated region
      $region9: #{tpu_custom_call.1} parent=5 // pred_check
        _
      $region10: #{tpu_custom_call.1} parent=5 // pred_check_branch
        %117 = sbr.rel (%p114) target = $region12
      $region11: #{tpu_custom_call.1} parent=5 // pred_region
        %s118 = ssub.s32 %s15, 1
        // Predicated region
        $region13: #{tpu_custom_call.1} parent=11 // pred_check
          %p119 = pneg %p76
        $region14: #{tpu_custom_call.1} parent=11 // pred_check_branch
          %121 = sbr.rel (%p119) target = $region16
        $region15: #{tpu_custom_call.1} parent=11 // pred_region
          %123 = vsyncadd [#allocation6], 0
          %s124 = sshll.u32 %s1, 4
          %s125 = int_to_ptr.hbm [resolvable:$true] %s124
          %s126 = sshll.u32 [#allocation5], 4
          %s127 = int_to_ptr.vmem [resolvable:$true] %s126
          %132 = dma.hbm_to_vmem [thread:$0]  %s125, 1024, %s127, [#allocation6], 64, 64, 4
        $region16: #{tpu_custom_call.1} parent=11 // pred_fallthru
          _
      $region12: #{tpu_custom_call.1} parent=5 // pred_fallthru
        _
      %p133 = scmp.lt.s32.totalorder %s15, 2
      // Predicated region
      $region17: #{tpu_custom_call.1} parent=5 // pred_check
        %p134 = pneg %p133
      $region18: #{tpu_custom_call.1} parent=5 // pred_check_branch
        %136 = sbr.rel (%p134) target = $region20
      $region19: #{tpu_custom_call.1} parent=5 // pred_region
        // Predicated region
        $region21: #{tpu_custom_call.1} parent=19 // pred_check
          %p137 = pneg %p49
        $region22: #{tpu_custom_call.1} parent=19 // pred_check_branch
          %139 = sbr.rel (%p137) target = $region24
        $region23: #{tpu_custom_call.1} parent=19 // pred_region
          %s140 = sand.u32 %s39, 1
          %s141 = scalar_lea.sflag [#allocation3], %s140
          %s142 = sand.u32 %s39, 1
          %s143 = smul.addr %s142, 128
          %s144 = scalar_lea.vmem [#allocation2], %s143
          %s145 = smul.u32 32, %s23
          %147 = vsyncadd %s141, 0
          %s148 = smul.addr %s22, 32
          %s149 = sadd.s32 %s145, %s148
          %s150 = smul.addr %s149, 4
          %s151 = scalar_lea.hbm %s0, %s150
          %s152 = sshll.u32 %s151, 4
          %s153 = int_to_ptr.hbm [resolvable:$true] %s152
          %s154 = sshll.u32 %s144, 4
          %s155 = int_to_ptr.vmem [resolvable:$true] %s154
          %160 = dma.hbm_to_vmem [thread:$0]  %s153, 2048, %s155, %s141, 64, 64, 4
        $region24: #{tpu_custom_call.1} parent=19 // pred_fallthru
          _
      $region20: #{tpu_custom_call.1} parent=5 // pred_fallthru
        _
      %p161 = scmp.le.s32.totalorder 1, %s15
      %p162 = scmp.lt.s32.totalorder %s15, 3
      %p163 = pnand %p161, %p162
      %p164 = pneg %p163
      // Predicated region
      $region25: #{tpu_custom_call.1} parent=5 // pred_check
        _
      $region26: #{tpu_custom_call.1} parent=5 // pred_check_branch
        %166 = sbr.rel (%p163) target = $region28
      $region27: #{tpu_custom_call.1} parent=5 // pred_region
        %s167 = ssub.s32 %s15, 1
        %s168 = sand.u32 %s42, 1
        %s169 = scalar_lea.sflag [#allocation3], %s168
        %s170 = sand.u32 %s42, 1
        %s171 = smul.addr %s170, 128
        %s172 = scalar_lea.vmem [#allocation2], %s171
        // Predicated region
        $region29: #{tpu_custom_call.1} parent=27 // pred_check
          %p173 = pneg %p55
        $region30: #{tpu_custom_call.1} parent=27 // pred_check_branch
          %175 = sbr.rel (%p173) target = $region32
        $region31: #{tpu_custom_call.1} parent=27 // pred_region
          %177 = dma.done %s169, 2048
        $region32: #{tpu_custom_call.1} parent=27 // pred_fallthru
          _
        // Predicated region
        $region33: #{tpu_custom_call.1} parent=27 // pred_check
          %p178 = pneg %p76
        $region34: #{tpu_custom_call.1} parent=27 // pred_check_branch
          %180 = sbr.rel (%p178) target = $region36
        $region35: #{tpu_custom_call.1} parent=27 // pred_region
          %182 = dma.done [#allocation6], 1024
        $region36: #{tpu_custom_call.1} parent=27 // pred_fallthru
          _
        %s183 = sand.u32 %s42, 1
        %s184 = scalar_lea.sflag [#allocation3], %s183
        %s185 = sand.u32 %s42, 1
        %s186 = smul.addr %s185, 128
        %s187 = scalar_lea.vmem [#allocation2], %s186
        %p188 = pneg %p55
        %p189 = pneg %p52
        %p190 = pneg %p76
        %p191 = pneg %p73
        %p192 = pneg %p104
        %p193 = pneg %p101
        %s194 = sand.u32 %s91, 1
        %s195 = scalar_lea.sflag [#allocation4], %s194
        %s196 = sand.u32 %s91, 1
        %s197 = smul.addr %s196, 8
        %s198 = scalar_lea.vmem [#allocation7], %s197
        %s199 = smul.u32 32, %s25
        %v200 = vld [vmem:[%s172] sm:$0xf]
        %v201 = vld [vmem:[%s172 + $0x4] sm:$0xf]
        %v202 = vld [vmem:[%s172 + $0x8] sm:$0xf]
        %v203 = vld [vmem:[%s172 + $0xc] sm:$0xf]
        %v204 = vld [vmem:[%s172 + $0x10] sm:$0xf]
        %v205 = vld [vmem:[%s172 + $0x14] sm:$0xf]
        %v206 = vld [vmem:[%s172 + $0x18] sm:$0xf]
        %v207 = vld [vmem:[%s172 + $0x1c] sm:$0xf]
        %v208 = vld [vmem:[%s172 + $0x20] sm:$0xf]
        %v209 = vld [vmem:[%s172 + $0x24] sm:$0xf]
        %v210 = vld [vmem:[%s172 + $0x28] sm:$0xf]
        %v211 = vld [vmem:[%s172 + $0x2c] sm:$0xf]
        %v212 = vld [vmem:[%s172 + $0x30] sm:$0xf]
        %v213 = vld [vmem:[%s172 + $0x34] sm:$0xf]
        %v214 = vld [vmem:[%s172 + $0x38] sm:$0xf]
        %v215 = vld [vmem:[%s172 + $0x3c] sm:$0xf]
        %v216 = vld [vmem:[%s172 + $0x40] sm:$0xf]
        %v217 = vld [vmem:[%s172 + $0x44] sm:$0xf]
        %v218 = vld [vmem:[%s172 + $0x48] sm:$0xf]
        %v219 = vld [vmem:[%s172 + $0x4c] sm:$0xf]
        %v220 = vld [vmem:[%s172 + $0x50] sm:$0xf]
        %v221 = vld [vmem:[%s172 + $0x54] sm:$0xf]
        %v222 = vld [vmem:[%s172 + $0x58] sm:$0xf]
        %v223 = vld [vmem:[%s172 + $0x5c] sm:$0xf]
        %v224 = vld [vmem:[%s172 + $0x60] sm:$0xf]
        %v225 = vld [vmem:[%s172 + $0x64] sm:$0xf]
        %v226 = vld [vmem:[%s172 + $0x68] sm:$0xf]
        %v227 = vld [vmem:[%s172 + $0x6c] sm:$0xf]
        %v228 = vld [vmem:[%s172 + $0x70] sm:$0xf]
        %v229 = vld [vmem:[%s172 + $0x74] sm:$0xf]
        %v230 = vld [vmem:[%s172 + $0x78] sm:$0xf]
        %v231 = vld [vmem:[%s172 + $0x7c] sm:$0xf]
        %v232 = vld [vmem:[#allocation5] sm:$0xf]
        %v233 = vld [vmem:[#allocation5 + $0x4] sm:$0xf]
        %v234 = vld [vmem:[#allocation5 + $0x8] sm:$0xf]
        %v235 = vld [vmem:[#allocation5 + $0xc] sm:$0xf]
        %v236 = vld [vmem:[#allocation5 + $0x10] sm:$0xf]
        %v237 = vld [vmem:[#allocation5 + $0x14] sm:$0xf]
        %v238 = vld [vmem:[#allocation5 + $0x18] sm:$0xf]
        %v239 = vld [vmem:[#allocation5 + $0x1c] sm:$0xf]
        %v240 = vld [vmem:[#allocation5 + $0x20] sm:$0xf]
        %v241 = vld [vmem:[#allocation5 + $0x24] sm:$0xf]
        %v242 = vld [vmem:[#allocation5 + $0x28] sm:$0xf]
        %v243 = vld [vmem:[#allocation5 + $0x2c] sm:$0xf]
        %v244 = vld [vmem:[#allocation5 + $0x30] sm:$0xf]
        %v245 = vld [vmem:[#allocation5 + $0x34] sm:$0xf]
        %v246 = vld [vmem:[#allocation5 + $0x38] sm:$0xf]
        %v247 = vld [vmem:[#allocation5 + $0x3c] sm:$0xf]
        %v280 = vunpack.c.l.b16 %v200
        %v281 = vunpack.c.l.b16 %v201
        %v282 = vunpack.c.l.b16 %v202
        %v283 = vunpack.c.l.b16 %v203
        %v284 = vunpack.c.l.b16 %v204
        %v285 = vunpack.c.l.b16 %v205
        %v286 = vunpack.c.l.b16 %v206
        %v287 = vunpack.c.l.b16 %v207
        %v288 = vunpack.c.l.b16 %v208
        %v289 = vunpack.c.l.b16 %v209
        %v290 = vunpack.c.l.b16 %v210
        %v291 = vunpack.c.l.b16 %v211
        %v292 = vunpack.c.l.b16 %v212
        %v293 = vunpack.c.l.b16 %v213
        %v294 = vunpack.c.l.b16 %v214
        %v295 = vunpack.c.l.b16 %v215
        %v296 = vunpack.c.l.b16 %v216
        %v297 = vunpack.c.l.b16 %v217
        %v298 = vunpack.c.l.b16 %v218
        %v299 = vunpack.c.l.b16 %v219
        %v300 = vunpack.c.l.b16 %v220
        %v301 = vunpack.c.l.b16 %v221
        %v302 = vunpack.c.l.b16 %v222
        %v303 = vunpack.c.l.b16 %v223
        %v304 = vunpack.c.l.b16 %v224
        %v305 = vunpack.c.l.b16 %v225
        %v306 = vunpack.c.l.b16 %v226
        %v307 = vunpack.c.l.b16 %v227
        %v308 = vunpack.c.l.b16 %v228
        %v309 = vunpack.c.l.b16 %v229
        %v310 = vunpack.c.l.b16 %v230
        %v311 = vunpack.c.l.b16 %v231
        %v312 = vpack.c.b16 %v281, %v280
        %v313 = vpack.c.b16 %v283, %v282
        %v314 = vpack.c.b16 %v285, %v284
        %v315 = vpack.c.b16 %v287, %v286
        %v316 = vpack.c.b16 %v289, %v288
        %v317 = vpack.c.b16 %v291, %v290
        %v318 = vpack.c.b16 %v293, %v292
        %v319 = vpack.c.b16 %v295, %v294
        %v320 = vpack.c.b16 %v297, %v296
        %v321 = vpack.c.b16 %v299, %v298
        %v322 = vpack.c.b16 %v301, %v300
        %v323 = vpack.c.b16 %v303, %v302
        %v324 = vpack.c.b16 %v305, %v304
        %v325 = vpack.c.b16 %v307, %v306
        %v326 = vpack.c.b16 %v309, %v308
        %v327 = vpack.c.b16 %v311, %v310
        %v360 = vunpack.c.l.b16 %v232
        %v361 = vunpack.c.l.b16 %v233
        %v362 = vunpack.c.l.b16 %v234
        %v363 = vunpack.c.l.b16 %v235
        %v364 = vunpack.c.l.b16 %v236
        %v365 = vunpack.c.l.b16 %v237
        %v366 = vunpack.c.l.b16 %v238
        %v367 = vunpack.c.l.b16 %v239
        %v368 = vunpack.c.l.b16 %v240
        %v369 = vunpack.c.l.b16 %v241
        %v370 = vunpack.c.l.b16 %v242
        %v371 = vunpack.c.l.b16 %v243
        %v372 = vunpack.c.l.b16 %v244
        %v373 = vunpack.c.l.b16 %v245
        %v374 = vunpack.c.l.b16 %v246
        %v375 = vunpack.c.l.b16 %v247
        %v376 = vpack.c.b16 %v361, %v360
        %v377 = vpack.c.b16 %v363, %v362
        %v378 = vpack.c.b16 %v365, %v364
        %v379 = vpack.c.b16 %v367, %v366
        %v380 = vpack.c.b16 %v369, %v368
        %v381 = vpack.c.b16 %v371, %v370
        %v382 = vpack.c.b16 %v373, %v372
        %v383 = vpack.c.b16 %v375, %v374
        %392 = vmatpush.bf16.msra.mxu0 %v383
        %393 = vmatpush.bf16.msra.mxu0 %v382
        %394 = vmatpush.bf16.msra.mxu0 %v381
        %395 = vmatpush.bf16.msra.mxu0 %v380
        %396 = vmatpush.bf16.msra.mxu0 %v379
        %397 = vmatpush.bf16.msra.mxu0 %v378
        %398 = vmatpush.bf16.msra.mxu0 %v377
        %399 = vmatpush.bf16.msra.mxu0 %v376
        %400 = vmatmul.bf16.gmra.mxu0 %v312
        %v401 = vpop.f32.mrf.mxu0
        %v402 = vadd.f32 0.0, %v401
        %v403 = vpop.f32.mrf.mxu0
        %v404 = vadd.f32 0.0, %v403
        %405 = vmatmul.bf16.gmra.mxu0 %v313
        %v406 = vpop.f32.mrf.mxu0
        %v407 = vadd.f32 0.0, %v406
        %v408 = vpop.f32.mrf.mxu0
        %v409 = vadd.f32 0.0, %v408
        %410 = vmatmul.bf16.gmra.mxu0 %v314
        %v411 = vpop.f32.mrf.mxu0
        %v412 = vadd.f32 0.0, %v411
        %v413 = vpop.f32.mrf.mxu0
        %v414 = vadd.f32 0.0, %v413
        %415 = vmatmul.bf16.gmra.mxu0 %v315
        %v416 = vpop.f32.mrf.mxu0
        %v417 = vadd.f32 0.0, %v416
        %v418 = vpop.f32.mrf.mxu0
        %v419 = vadd.f32 0.0, %v418
        %420 = vmatmul.bf16.gmra.mxu0 %v316
        %v421 = vpop.f32.mrf.mxu0
        %v422 = vadd.f32 0.0, %v421
        %v423 = vpop.f32.mrf.mxu0
        %v424 = vadd.f32 0.0, %v423
        %425 = vmatmul.bf16.gmra.mxu0 %v317
        %v426 = vpop.f32.mrf.mxu0
        %v427 = vadd.f32 0.0, %v426
        %v428 = vpop.f32.mrf.mxu0
        %v429 = vadd.f32 0.0, %v428
        %430 = vmatmul.bf16.gmra.mxu0 %v318
        %v431 = vpop.f32.mrf.mxu0
        %v432 = vadd.f32 0.0, %v431
        %v433 = vpop.f32.mrf.mxu0
        %v434 = vadd.f32 0.0, %v433
        %435 = vmatmul.bf16.gmra.mxu0 %v319
        %v436 = vpop.f32.mrf.mxu0
        %v437 = vadd.f32 0.0, %v436
        %v438 = vpop.f32.mrf.mxu0
        %v439 = vadd.f32 0.0, %v438
        %440 = vmatmul.bf16.gmra.mxu0 %v320
        %v441 = vpop.f32.mrf.mxu0
        %v442 = vadd.f32 0.0, %v441
        %v443 = vpop.f32.mrf.mxu0
        %v444 = vadd.f32 0.0, %v443
        %445 = vmatmul.bf16.gmra.mxu0 %v321
        %v446 = vpop.f32.mrf.mxu0
        %v447 = vadd.f32 0.0, %v446
        %v448 = vpop.f32.mrf.mxu0
        %v449 = vadd.f32 0.0, %v448
        %450 = vmatmul.bf16.gmra.mxu0 %v322
        %v451 = vpop.f32.mrf.mxu0
        %v452 = vadd.f32 0.0, %v451
        %v453 = vpop.f32.mrf.mxu0
        %v454 = vadd.f32 0.0, %v453
        %455 = vmatmul.bf16.gmra.mxu0 %v323
        %v456 = vpop.f32.mrf.mxu0
        %v457 = vadd.f32 0.0, %v456
        %v458 = vpop.f32.mrf.mxu0
        %v459 = vadd.f32 0.0, %v458
        %460 = vmatmul.bf16.gmra.mxu0 %v324
        %v461 = vpop.f32.mrf.mxu0
        %v462 = vadd.f32 0.0, %v461
        %v463 = vpop.f32.mrf.mxu0
        %v464 = vadd.f32 0.0, %v463
        %465 = vmatmul.bf16.gmra.mxu0 %v325
        %v466 = vpop.f32.mrf.mxu0
        %v467 = vadd.f32 0.0, %v466
        %v468 = vpop.f32.mrf.mxu0
        %v469 = vadd.f32 0.0, %v468
        %470 = vmatmul.bf16.gmra.mxu0 %v326
        %v471 = vpop.f32.mrf.mxu0
        %v472 = vadd.f32 0.0, %v471
        %v473 = vpop.f32.mrf.mxu0
        %v474 = vadd.f32 0.0, %v473
        %475 = vmatmul.bf16.gmra.mxu0 %v327
        %v476 = vpop.f32.mrf.mxu0
        %v477 = vadd.f32 0.0, %v476
        %v478 = vpop.f32.mrf.mxu0
        %v479 = vadd.f32 0.0, %v478
        %480 = vdwg.mxu0
        %v481 = vadd.f32 %v402, %v404
        %v482 = vadd.f32 %v481, %v407
        %v483 = vadd.f32 %v482, %v409
        %v484 = vadd.f32 %v483, %v412
        %v485 = vadd.f32 %v484, %v414
        %v486 = vadd.f32 %v485, %v417
        %v487 = vadd.f32 %v486, %v419
        %v488 = vadd.f32 %v487, %v422
        %v489 = vadd.f32 %v488, %v424
        %v490 = vadd.f32 %v489, %v427
        %v491 = vadd.f32 %v490, %v429
        %v492 = vadd.f32 %v491, %v432
        %v493 = vadd.f32 %v492, %v434
        %v494 = vadd.f32 %v493, %v437
        %v495 = vadd.f32 %v494, %v439
        %v496 = vadd.f32 %v495, %v442
        %v497 = vadd.f32 %v496, %v444
        %v498 = vadd.f32 %v497, %v447
        %v499 = vadd.f32 %v498, %v449
        %v500 = vadd.f32 %v499, %v452
        %v501 = vadd.f32 %v500, %v454
        %v502 = vadd.f32 %v501, %v457
        %v503 = vadd.f32 %v502, %v459
        %v504 = vadd.f32 %v503, %v462
        %v505 = vadd.f32 %v504, %v464
        %v506 = vadd.f32 %v505, %v467
        %v507 = vadd.f32 %v506, %v469
        %v508 = vadd.f32 %v507, %v472
        %v509 = vadd.f32 %v508, %v474
        %v510 = vadd.f32 %v509, %v477
        %v511 = vadd.f32 %v510, %v479
        %v512 = vrot.slane %v511, 4
        %v513 = vadd.f32 %v511, %v512
        %v514 = vrot.slane %v513, 2
        %v515 = vadd.f32 %v513, %v514
        %v516 = vrot.slane %v515, 1
        %v517 = vadd.f32 %v515, %v516
        %v518 = vmul.f32 %v402, %v402
        %v519 = vmul.f32 %v404, %v404
        %v520 = vmul.f32 %v407, %v407
        %v521 = vmul.f32 %v409, %v409
        %v522 = vmul.f32 %v412, %v412
        %v523 = vmul.f32 %v414, %v414
        %v524 = vmul.f32 %v417, %v417
        %v525 = vmul.f32 %v419, %v419
        %v526 = vmul.f32 %v422, %v422
        %v527 = vmul.f32 %v424, %v424
        %v528 = vmul.f32 %v427, %v427
        %v529 = vmul.f32 %v429, %v429
        %v530 = vmul.f32 %v432, %v432
        %v531 = vmul.f32 %v434, %v434
        %v532 = vmul.f32 %v437, %v437
        %v533 = vmul.f32 %v439, %v439
        %v534 = vmul.f32 %v442, %v442
        %v535 = vmul.f32 %v444, %v444
        %v536 = vmul.f32 %v447, %v447
        %v537 = vmul.f32 %v449, %v449
        %v538 = vmul.f32 %v452, %v452
        %v539 = vmul.f32 %v454, %v454
        %v540 = vmul.f32 %v457, %v457
        %v541 = vmul.f32 %v459, %v459
        %v542 = vmul.f32 %v462, %v462
        %v543 = vmul.f32 %v464, %v464
        %v544 = vmul.f32 %v467, %v467
        %v545 = vmul.f32 %v469, %v469
        %v546 = vmul.f32 %v472, %v472
        %v547 = vmul.f32 %v474, %v474
        %v548 = vmul.f32 %v477, %v477
        %v549 = vmul.f32 %v479, %v479
        %v550 = vadd.f32 %v518, %v519
        %v551 = vadd.f32 %v550, %v520
        %v552 = vadd.f32 %v551, %v521
        %v553 = vadd.f32 %v552, %v522
        %v554 = vadd.f32 %v553, %v523
        %v555 = vadd.f32 %v554, %v524
        %v556 = vadd.f32 %v555, %v525
        %v557 = vadd.f32 %v556, %v526
        %v558 = vadd.f32 %v557, %v527
        %v559 = vadd.f32 %v558, %v528
        %v560 = vadd.f32 %v559, %v529
        %v561 = vadd.f32 %v560, %v530
        %v562 = vadd.f32 %v561, %v531
        %v563 = vadd.f32 %v562, %v532
        %v564 = vadd.f32 %v563, %v533
        %v565 = vadd.f32 %v564, %v534
        %v566 = vadd.f32 %v565, %v535
        %v567 = vadd.f32 %v566, %v536
        %v568 = vadd.f32 %v567, %v537
        %v569 = vadd.f32 %v568, %v538
        %v570 = vadd.f32 %v569, %v539
        %v571 = vadd.f32 %v570, %v540
        %v572 = vadd.f32 %v571, %v541
        %v573 = vadd.f32 %v572, %v542
        %v574 = vadd.f32 %v573, %v543
        %v575 = vadd.f32 %v574, %v544
        %v576 = vadd.f32 %v575, %v545
        %v577 = vadd.f32 %v576, %v546
        %v578 = vadd.f32 %v577, %v547
        %v579 = vadd.f32 %v578, %v548
        %v580 = vadd.f32 %v579, %v549
        %v581 = vrot.slane %v580, 4
        %v582 = vadd.f32 %v580, %v581
        %v583 = vrot.slane %v582, 2
        %v584 = vadd.f32 %v582, %v583
        %v585 = vrot.slane %v584, 1
        %v586 = vadd.f32 %v584, %v585
        %vm587 = vcmask 1040384
        %v588 = vsel %vm587, %v517, %v586
        %vm589 = vcmask 1041408
        %v590 = vsel %vm589, %v588, 0.0
        %591 = vst [vmem:[%s198] sm:$0xff] %v590
        %s592 = sand.u32 %s91, 1
        %s593 = scalar_lea.sflag [#allocation4], %s592
        %s594 = sand.u32 %s91, 1
        %s595 = smul.addr %s594, 8
        %s596 = scalar_lea.vmem [#allocation7], %s595
        // Predicated region
        $region37: #{tpu_custom_call.1} parent=27 // pred_check
          %p597 = pneg %p101
        $region38: #{tpu_custom_call.1} parent=27 // pred_check_branch
          %599 = sbr.rel (%p597) target = $region40
        $region39: #{tpu_custom_call.1} parent=27 // pred_region
          %601 = vsyncadd %s593, 0
          %s602 = sadd.s32 %s25, %s24
          %s603 = smul.addr %s602, 8
          %s604 = scalar_lea.hbm %s2, %s603
          %s606 = sshll.u32 %s596, 4
          %s607 = int_to_ptr.vmem [resolvable:$true] %s606
          %s608 = sshll.u32 %s604, 4
          %s609 = int_to_ptr.hbm [resolvable:$true] %s608
          %611 = dma.vmem_to_hbm [thread:$0]  %s607, 128, %s609, %s593
        $region40: #{tpu_custom_call.1} parent=27 // pred_fallthru
          _
      $region28: #{tpu_custom_call.1} parent=5 // pred_fallthru
        _
      %p612 = scmp.le.s32.totalorder 2, %s15
      // Predicated region
      $region41: #{tpu_custom_call.1} parent=5 // pred_check
        %p613 = pneg %p612
      $region42: #{tpu_custom_call.1} parent=5 // pred_check_branch
        %615 = sbr.rel (%p613) target = $region44
      $region43: #{tpu_custom_call.1} parent=5 // pred_region
        %s616 = ssub.s32 %s15, 2
        // Predicated region
        $region45: #{tpu_custom_call.1} parent=43 // pred_check
          %p617 = pneg %p107
        $region46: #{tpu_custom_call.1} parent=43 // pred_check_branch
          %619 = sbr.rel (%p617) target = $region48
        $region47: #{tpu_custom_call.1} parent=43 // pred_region
          %s620 = sand.u32 %s92, 1
          %s621 = scalar_lea.sflag [#allocation4], %s620
          %s622 = sand.u32 %s92, 1
          %s623 = smul.addr %s622, 8
          %s624 = scalar_lea.vmem [#allocation7], %s623
          %626 = dma.done %s621, 128
        $region48: #{tpu_custom_call.1} parent=43 // pred_fallthru
          _
      $region44: #{tpu_custom_call.1} parent=5 // pred_fallthru
        _
    $region6: #{tpu_custom_call.1} parent=1 // loop_footer
      %s19 = sadd.s32 1, %s15
    $region7: #{tpu_custom_call.1} parent=1 // loop_footer_branch
      %14 = sbr.rel target = $region3
    $region8: #{tpu_custom_call.1} parent=1 // loop_exit
      _
    %627 = vsyncpa [#allocation3], 1
    %s628 = scalar_lea.sflag [#allocation3], 1
    %629 = vsyncpa %s628, 1
    %630 = vsyncpa [#allocation6], 1
    %631 = vsyncpa [#allocation4], 1
    %s632 = scalar_lea.sflag [#allocation4], 1
    %633 = vsyncpa %s632, 1

</llo_original>
